<compile_context>
chip_gen: v6e
topology: v6e:2x2x1
jax: 0.10.0
libtpu: 0.0.40
codegen_flags: <defaults>
</compile_context>

<pallas_src>
import functools

import jax
import jax.numpy as jnp
import numpy as np
from jax.experimental import pallas as pl
from jax.experimental.pallas import tpu as pltpu

_VMEM = functools.partial(pl.BlockSpec, memory_space=pltpu.MemorySpace.VMEM)


def _round_up(n, m):
    return ((n + m - 1) // m) * m


def _make_layout(n_layers, D, H, A):
    """Static row offsets of every weight segment inside the packed slab."""
    cols = _round_up(max(3 * H, A, H), 128)      # one lane-dense column width for everything
    layout = {}
    off = 0

    def add(name, rows):
        nonlocal off
        layout[name] = off
        off += _round_up(rows, 8)                # keep every segment sublane-aligned

    add("Wa", H)                                 # attn_W.weight^T   (H, A)
    add("Ua", D)                                 # attn_U.weight^T   (D, A)
    add("attn_bw", 2)                            # row0 = attn_b, row1 = attn_w.weight
    for l in range(n_layers):
        din = D if l == 0 else H
        add(f"Wih{l}", din)                      # W_ih^T (din, 3H), gate order (r|z|n)
        add(f"Whh{l}", H)                        # W_hh^T (H, 3H)
        add(f"b{l}", 2)                          # row0 = (b_ih+b_hh)_rz | b_ih_n ; row1 = 0 | b_hh_n
    add("Wout", H)                               # out.weight^T (H, H)
    add("bout", 1)                               # out.bias     (1, H)
    return layout, off, cols


def pack_params(params, n_layers, D, H, A):
    """Pack every weight into one zero-padded (rows, 128) f32 slab (once, outside jit)."""
    layout, rows, cols = _make_layout(n_layers, D, H, A)
    slab = np.zeros((rows, cols), np.float32)

    def put(name, arr):
        arr = np.asarray(arr, np.float32)
        r0 = layout[name]
        slab[r0:r0 + arr.shape[0], :arr.shape[1]] = arr

    put("Wa", params["W_attn_t"])
    put("Ua", params["U_attn_t"])
    bw = np.zeros((2, A), np.float32)
    bw[0] = np.asarray(params["b_attn"], np.float32)[0]
    bw[1] = np.asarray(params["w_attn"], np.float32)[0]
    put("attn_bw", bw)
    for l in range(n_layers):
        put(f"Wih{l}", params["Wih"][l])
        put(f"Whh{l}", params["Whh"][l])
        bih = np.asarray(params["bih"][l], np.float32)[0]
        bhh = np.asarray(params["bhh"][l], np.float32)[0]
        b = np.zeros((2, 3 * H), np.float32)
        b[0, :2 * H] = bih[:2 * H] + bhh[:2 * H]     # r,z biases pre-summed
        b[0, 2 * H:] = bih[2 * H:]                   # n-gate input bias
        b[1, 2 * H:] = bhh[2 * H:]                   # n-gate hidden bias (multiplied by r)
        put(f"b{l}", b)
    put("Wout", params["W_out_t"])
    put("bout", params["b_out"])
    return jnp.asarray(slab)


def _make_fused_kernel(layout, n_layers, T, B, D, H):
    TB = T * B
    f32 = jnp.float32

    def kernel(slab_ref, dec_ref, hidden_ref, out_ref, hnew_ref):
        def seg(name, rows):                     # static, sublane-aligned slab view
            r0 = layout[name]
            return slab_ref[r0:r0 + rows, :]

        dec = dec_ref[...]                                                   # (T*B, D), row = t*B + b

        # ---- temporal attention over decoder hiddens ----
        Wh = jnp.dot(hidden_ref[n_layers - 1], seg("Wa", H),
                     preferred_element_type=f32)                             # (B, C)
        # broadcast Wh over time via an iota-built 0/1 selection matrix (no extra input DMA)
        r1 = jax.lax.broadcasted_iota(jnp.int32, (TB, B), 0)
        c1 = jax.lax.broadcasted_iota(jnp.int32, (TB, B), 1)
        bsel = (r1 % B == c1).astype(f32)                                    # (T*B, B)
        Wh_tb = jnp.dot(bsel, Wh, preferred_element_type=f32)                # (T*B, C)
        Uv = jnp.dot(dec, seg("Ua", D), preferred_element_type=f32)          # (T*B, C)
        attn_bw = seg("attn_bw", 2)                                          # (2, C)
        betas = jnp.tanh(Wh_tb + Uv + attn_bw[0:1, :])                       # (T*B, C)
        # attn_w has N == 1 -> keep it off the MXU: VPU multiply + lane reduce.
        score = jnp.sum(betas * attn_bw[1:2, :], axis=-1, keepdims=True)     # (T*B, 1)
        weighted = score * dec                                               # (T*B, D)
        # mean over time == matmul with an iota-built (B, T*B) matrix of 1/T entries.
        r2 = jax.lax.broadcasted_iota(jnp.int32, (B, TB), 0)
        c2 = jax.lax.broadcasted_iota(jnp.int32, (B, TB), 1)
        pool = jnp.where(c2 % B == r2, f32(1.0 / T), f32(0.0))               # (B, T*B)
        x = jnp.dot(pool, weighted, preferred_element_type=f32)              # (B, D)

        # ---- n_layers stacked GRU cells (seq_len == 1), gate order (r, z, n) ----
        for l in range(n_layers):
            din = D if l == 0 else H
            Wih = seg(f"Wih{l}", din)
            Whh = seg(f"Whh{l}", H)
            bl = seg(f"b{l}", 2)
            h = hidden_ref[l]                                                # (B, H)
            gi = jnp.dot(x, Wih, preferred_element_type=f32) + bl[0:1, :]    # (B, C)
            gh = jnp.dot(h, Whh, preferred_element_type=f32) + bl[1:2, :]    # (B, C)
            s = gi + gh                                                      # add once, slice once
            r = jax.nn.sigmoid(s[:, :H])
            z = jax.nn.sigmoid(s[:, H:2 * H])
            n = jnp.tanh(gi[:, 2 * H:3 * H] + r * gh[:, 2 * H:3 * H])
            h_new = (1.0 - z) * n + z * h
            hnew_ref[l] = h_new                                              # in-place (aliased) state
            x = h_new

        # ---- output projection ----
        y = jnp.dot(x, seg("Wout", H), preferred_element_type=f32) + seg("bout", 1)
        out_ref[...] = y[:, :H]

    return kernel


def make_forward(n_layers, T, B, D, H, A):
    layout, rows, cols = _make_layout(n_layers, D, H, A)
    kernel = _make_fused_kernel(layout, n_layers, T, B, D, H)
    TB = T * B

    flops = 2 * (B * H * A + TB * B * A + TB * D * A + B * TB * D + B * H * H)
    for l in range(n_layers):
        din = D if l == 0 else H
        flops += 2 * B * (din + H) * 3 * H
    transcendentals = TB * A + n_layers * B * 3 * H
    bytes_accessed = 4 * (rows * cols + TB * D + 2 * n_layers * B * H + B * H)
    cost = pl.CostEstimate(flops=int(flops),
                           transcendentals=int(transcendentals),
                           bytes_accessed=int(bytes_accessed))

    call = pl.pallas_call(
        kernel,
        out_shape=(jax.ShapeDtypeStruct((B, H), jnp.float32),
                   jax.ShapeDtypeStruct((n_layers, B, H), jnp.float32)),
        in_specs=[_VMEM(), _VMEM(), _VMEM()],         # slab, dec2, hidden
        out_specs=(_VMEM(), _VMEM()),                  # out, hidden_new
        input_output_aliases={2: 1},                   # P8: new state overwrites old state buffer
        cost_estimate=cost,
    )

    @jax.jit
    def forward(slab, hidden, decoder_hiddens):
        # decoder is single-layer; a >1 second dim would silently interleave layers.
        assert decoder_hiddens.shape == (T, 1, B, D)
        dec2 = decoder_hiddens.reshape(TB, D)          # free XLA reshape, row = t*B + b
        return call(slab, dec2, hidden)

    return forward


# ---------------------------------------------------------------------------
# Parameters (PyTorch-equivalent layout) + pure-JAX reference for verification.
# ---------------------------------------------------------------------------
def init_params(key, model_name, n_layers, D, H, A):
    assert model_name == "GRU"     # TODO(synk): LSTM branch not implemented
    ks = iter(jax.random.split(key, 64))
    p = {}
    p["W_attn_t"] = jax.random.normal(next(ks), (H, A), jnp.float32) * 0.1   # attn_W.weight^T
    p["U_attn_t"] = jax.random.normal(next(ks), (D, A), jnp.float32) * 0.1   # attn_U.weight^T
    p["b_attn"] = jnp.ones((1, A), jnp.float32)                              # torch.ones(attn_size)
    p["w_attn"] = jax.random.normal(next(ks), (1, A), jnp.float32) * 0.1     # attn_w.weight (row)
    Wih, Whh, bih, bhh = [], [], [], []
    for l in range(n_layers):
        din = D if l == 0 else H
        Wih.append(jax.random.normal(next(ks), (din, 3 * H), jnp.float32) * 0.1)  # W_ih^T (r|z|n)
        Whh.append(jax.random.normal(next(ks), (H, 3 * H), jnp.float32) * 0.1)    # W_hh^T (r|z|n)
        bih.append(jax.random.normal(next(ks), (1, 3 * H), jnp.float32) * 0.1)
        bhh.append(jax.random.normal(next(ks), (1, 3 * H), jnp.float32) * 0.1)
    p["Wih"], p["Whh"], p["bih"], p["bhh"] = Wih, Whh, bih, bhh
    p["W_out_t"] = jax.random.normal(next(ks), (H, H), jnp.float32) * 0.1    # out.weight^T
    p["b_out"] = jax.random.normal(next(ks), (1, H), jnp.float32) * 0.1
    return p


def reference_forward(params, hidden, decoder_hiddens):
    T, _one, B, D = decoder_hiddens.shape
    L, _, H = hidden.shape
    dec = decoder_hiddens.reshape(T, B, D)
    Wh = hidden[-1] @ params["W_attn_t"]                                     # (B, A)
    Uv = jnp.einsum("tbd,da->tba", dec, params["U_attn_t"])                  # (T, B, A)
    betas = jnp.tanh(Wh[None] + Uv + params["b_attn"])                       # (T, B, A)
    score = jnp.sum(betas * params["w_attn"], axis=-1, keepdims=True)        # (T, B, 1)
    x = jnp.mean(score * dec, axis=0)                                        # (B, D)
    new_h = []
    for l in range(L):
        h = hidden[l]
        gi = x @ params["Wih"][l] + params["bih"][l]
        gh = h @ params["Whh"][l] + params["bhh"][l]
        r = jax.nn.sigmoid(gi[:, :H] + gh[:, :H])
        z = jax.nn.sigmoid(gi[:, H:2 * H] + gh[:, H:2 * H])
        n = jnp.tanh(gi[:, 2 * H:] + r * gh[:, 2 * H:])
        hn = (1.0 - z) * n + z * h
        new_h.append(hn)
        x = hn
    out = x @ params["W_out_t"] + params["b_out"]
    return out, jnp.stack(new_h)


if __name__ == "__main__":
    model_name = "GRU"
    n_layers, D, H, A = 2, 16, 32, 24     # n_layers, decoder_hidden_size, hidden_size, attn_size
    T, B = 6, 2                           # caption length, batch

    key = jax.random.PRNGKey(0)
    kp, kh, kd = jax.random.split(key, 3)
    params = init_params(kp, model_name, n_layers, D, H, A)
    hidden = jax.random.normal(kh, (n_layers, B, H), jnp.float32)
    decoder_hiddens = jax.random.normal(kd, (T, 1, B, D), jnp.float32)

    slab = pack_params(params, n_layers, D, H, A)       # one-time weight packing (outside jit)
    forward = make_forward(n_layers, T, B, D, H, A)

    out, hid = forward(slab, hidden, decoder_hiddens)
    jax.block_until_ready((out, hid))

    ref_out, ref_hid = reference_forward(params, hidden, decoder_hiddens)
    np.testing.assert_allclose(np.asarray(out), np.asarray(ref_out), rtol=1e-4, atol=1e-5)
    np.testing.assert_allclose(np.asarray(hid), np.asarray(ref_hid), rtol=1e-4, atol=1e-5)

    print("KERNEL_OK")
</pallas_src>

<mosaic_0001>
module attributes {stable_mosaic.version = 11 : i64} {
  func.func @kernel(%arg0: memref<224x128xf32, #tpu.memory_space<vmem>>, %arg1: memref<12x16xf32, #tpu.memory_space<vmem>>, %arg2: memref<2x2x32xf32, #tpu.memory_space<vmem>>, %arg3: memref<2x32xf32, #tpu.memory_space<vmem>>, %arg4: memref<2x2x32xf32, #tpu.memory_space<vmem>>) attributes {dimension_semantics = [], scalar_prefetch = 0 : i64, scratch_operands = 0 : i64, tpu.core_type = #tpu.core_type<tc>} {
    %c0 = arith.constant 0 : index
    %c0_0 = arith.constant 0 : index
    %0 = vector.load %arg1[%c0, %c0_0] : memref<12x16xf32, #tpu.memory_space<vmem>>, vector<12x16xf32>
    %c1 = arith.constant 1 : index
    %c0_1 = arith.constant 0 : index
    %c0_2 = arith.constant 0 : index
    %1 = vector.load %arg2[%c1, %c0_1, %c0_2] : memref<2x2x32xf32, #tpu.memory_space<vmem>>, vector<1x2x32xf32>
    %2 = vector.shape_cast %1 : vector<1x2x32xf32> to vector<2x32xf32>
    %c0_3 = arith.constant 0 : index
    %c0_4 = arith.constant 0 : index
    %3 = vector.load %arg0[%c0_3, %c0_4] : memref<224x128xf32, #tpu.memory_space<vmem>>, vector<32x128xf32>
    %cst = arith.constant dense<0.000000e+00> : vector<2x128xf32>
    %4 = tpu.matmul %2, %3, %cst {dimension_numbers = #tpu.dot_dimension_numbers<[1], [0], [0], [1], [0, 0, 1, 1], [], []>} : vector<2x32xf32>, vector<32x128xf32>, vector<2x128xf32> -> vector<2x128xf32>
    %5 = tpu.iota {dimensions = array<i32: 0>} : vector<12x2xi32>
    %6 = tpu.iota {dimensions = array<i32: 1>} : vector<12x2xi32>
    %c2_i32 = arith.constant 2 : i32
    %c0_i32 = arith.constant 0 : i32
    %7 = arith.cmpi eq, %c2_i32, %c0_i32 : i32
    %c1_i32 = arith.constant 1 : i32
    %8 = arith.select %7, %c1_i32, %c2_i32 : i32
    %9 = vector.broadcast %8 : i32 to vector<12x2xi32>
    %10 = arith.remsi %5, %9 : vector<12x2xi32>
    %c0_i32_5 = arith.constant 0 : i32
    %11 = vector.broadcast %c0_i32_5 : i32 to vector<12x2xi32>
    %12 = arith.cmpi ne, %10, %11 : vector<12x2xi32>
    %c0_i32_6 = arith.constant 0 : i32
    %13 = vector.broadcast %c0_i32_6 : i32 to vector<12x2xi32>
    %14 = arith.cmpi slt, %10, %13 : vector<12x2xi32>
    %c0_i32_7 = arith.constant 0 : i32
    %15 = arith.cmpi slt, %8, %c0_i32_7 : i32
    %16 = vector.broadcast %15 : i1 to vector<12x2xi1>
    %17 = vector.broadcast %16 : vector<12x2xi1> to vector<12x2xi1>
    %18 = arith.xori %14, %17 : vector<12x2xi1>
    %19 = arith.andi %18, %12 : vector<12x2xi1>
    %20 = vector.broadcast %8 : i32 to vector<12x2xi32>
    %21 = arith.addi %10, %20 : vector<12x2xi32>
    %22 = arith.select %19, %21, %10 : vector<12x2xi1>, vector<12x2xi32>
    %23 = arith.cmpi eq, %22, %6 : vector<12x2xi32>
    %24 = arith.extui %23 : vector<12x2xi1> to vector<12x2xi32>
    %25 = arith.sitofp %24 : vector<12x2xi32> to vector<12x2xf32>
    %cst_8 = arith.constant dense<0.000000e+00> : vector<12x128xf32>
    %26 = tpu.matmul %25, %4, %cst_8 {dimension_numbers = #tpu.dot_dimension_numbers<[1], [0], [0], [1], [0, 0, 1, 1], [], []>} : vector<12x2xf32>, vector<2x128xf32>, vector<12x128xf32> -> vector<12x128xf32>
    %c32 = arith.constant 32 : index
    %c0_9 = arith.constant 0 : index
    %27 = vector.load %arg0[%c32, %c0_9] : memref<224x128xf32, #tpu.memory_space<vmem>>, vector<16x128xf32>
    %cst_10 = arith.constant dense<0.000000e+00> : vector<12x128xf32>
    %28 = tpu.matmul %0, %27, %cst_10 {dimension_numbers = #tpu.dot_dimension_numbers<[1], [0], [0], [1], [0, 0, 1, 1], [], []>} : vector<12x16xf32>, vector<16x128xf32>, vector<12x128xf32> -> vector<12x128xf32>
    %c48 = arith.constant 48 : index
    %c0_11 = arith.constant 0 : index
    %29 = vector.load %arg0[%c48, %c0_11] : memref<224x128xf32, #tpu.memory_space<vmem>>, vector<2x128xf32>
    %30 = arith.addf %26, %28 : vector<12x128xf32>
    %31 = vector.extract_strided_slice %29 {offsets = [0, 0], sizes = [1, 128], strides = [1, 1]} : vector<2x128xf32> to vector<1x128xf32>
    %32 = vector.broadcast %31 : vector<1x128xf32> to vector<12x128xf32>
    %33 = arith.addf %30, %32 : vector<12x128xf32>
    %34 = math.tanh %33 : vector<12x128xf32>
    %35 = vector.extract_strided_slice %29 {offsets = [1, 0], sizes = [1, 128], strides = [1, 1]} : vector<2x128xf32> to vector<1x128xf32>
    %36 = vector.broadcast %35 : vector<1x128xf32> to vector<12x128xf32>
    %37 = arith.mulf %34, %36 : vector<12x128xf32>
    %cst_12 = arith.constant dense<0.000000e+00> : vector<12xf32>
    %38 = vector.multi_reduction <add>, %37, %cst_12 [1] : vector<12x128xf32> to vector<12xf32>
    %39 = vector.shape_cast %38 : vector<12xf32> to vector<12x1xf32>
    %40 = vector.broadcast %39 : vector<12x1xf32> to vector<12x16xf32>
    %41 = arith.mulf %40, %0 : vector<12x16xf32>
    %42 = tpu.iota {dimensions = array<i32: 0>} : vector<2x12xi32>
    %43 = tpu.iota {dimensions = array<i32: 1>} : vector<2x12xi32>
    %c2_i32_13 = arith.constant 2 : i32
    %c0_i32_14 = arith.constant 0 : i32
    %44 = arith.cmpi eq, %c2_i32_13, %c0_i32_14 : i32
    %c1_i32_15 = arith.constant 1 : i32
    %45 = arith.select %44, %c1_i32_15, %c2_i32_13 : i32
    %46 = vector.broadcast %45 : i32 to vector<2x12xi32>
    %47 = arith.remsi %43, %46 : vector<2x12xi32>
    %c0_i32_16 = arith.constant 0 : i32
    %48 = vector.broadcast %c0_i32_16 : i32 to vector<2x12xi32>
    %49 = arith.cmpi ne, %47, %48 : vector<2x12xi32>
    %c0_i32_17 = arith.constant 0 : i32
    %50 = vector.broadcast %c0_i32_17 : i32 to vector<2x12xi32>
    %51 = arith.cmpi slt, %47, %50 : vector<2x12xi32>
    %c0_i32_18 = arith.constant 0 : i32
    %52 = arith.cmpi slt, %45, %c0_i32_18 : i32
    %53 = vector.broadcast %52 : i1 to vector<2x12xi1>
    %54 = vector.broadcast %53 : vector<2x12xi1> to vector<2x12xi1>
    %55 = arith.xori %51, %54 : vector<2x12xi1>
    %56 = arith.andi %55, %49 : vector<2x12xi1>
    %57 = vector.broadcast %45 : i32 to vector<2x12xi32>
    %58 = arith.addi %47, %57 : vector<2x12xi32>
    %59 = arith.select %56, %58, %47 : vector<2x12xi1>, vector<2x12xi32>
    %60 = arith.cmpi eq, %59, %42 : vector<2x12xi32>
    %cst_19 = arith.constant 0.166666672 : f32
    %cst_20 = arith.constant 0.000000e+00 : f32
    %61 = vector.broadcast %cst_19 : f32 to vector<2x12xf32>
    %62 = vector.broadcast %cst_20 : f32 to vector<2x12xf32>
    %63 = arith.select %60, %61, %62 : vector<2x12xi1>, vector<2x12xf32>
    %cst_21 = arith.constant dense<0.000000e+00> : vector<2x16xf32>
    %64 = tpu.matmul %63, %41, %cst_21 {dimension_numbers = #tpu.dot_dimension_numbers<[1], [0], [0], [1], [0, 0, 1, 1], [], []>} : vector<2x12xf32>, vector<12x16xf32>, vector<2x16xf32> -> vector<2x16xf32>
    %c56 = arith.constant 56 : index
    %c0_22 = arith.constant 0 : index
    %65 = vector.load %arg0[%c56, %c0_22] : memref<224x128xf32, #tpu.memory_space<vmem>>, vector<16x128xf32>
    %c72 = arith.constant 72 : index
    %c0_23 = arith.constant 0 : index
    %66 = vector.load %arg0[%c72, %c0_23] : memref<224x128xf32, #tpu.memory_space<vmem>>, vector<32x128xf32>
    %c104 = arith.constant 104 : index
    %c0_24 = arith.constant 0 : index
    %67 = vector.load %arg0[%c104, %c0_24] : memref<224x128xf32, #tpu.memory_space<vmem>>, vector<2x128xf32>
    %c0_25 = arith.constant 0 : index
    %c0_26 = arith.constant 0 : index
    %c0_27 = arith.constant 0 : index
    %68 = vector.load %arg2[%c0_25, %c0_26, %c0_27] : memref<2x2x32xf32, #tpu.memory_space<vmem>>, vector<1x2x32xf32>
    %69 = vector.shape_cast %68 : vector<1x2x32xf32> to vector<2x32xf32>
    %cst_28 = arith.constant dense<0.000000e+00> : vector<2x128xf32>
    %70 = tpu.matmul %64, %65, %cst_28 {dimension_numbers = #tpu.dot_dimension_numbers<[1], [0], [0], [1], [0, 0, 1, 1], [], []>} : vector<2x16xf32>, vector<16x128xf32>, vector<2x128xf32> -> vector<2x128xf32>
    %71 = vector.extract_strided_slice %67 {offsets = [0, 0], sizes = [1, 128], strides = [1, 1]} : vector<2x128xf32> to vector<1x128xf32>
    %72 = vector.broadcast %71 : vector<1x128xf32> to vector<2x128xf32>
    %73 = arith.addf %70, %72 : vector<2x128xf32>
    %cst_29 = arith.constant dense<0.000000e+00> : vector<2x128xf32>
    %74 = tpu.matmul %69, %66, %cst_29 {dimension_numbers = #tpu.dot_dimension_numbers<[1], [0], [0], [1], [0, 0, 1, 1], [], []>} : vector<2x32xf32>, vector<32x128xf32>, vector<2x128xf32> -> vector<2x128xf32>
    %75 = vector.extract_strided_slice %67 {offsets = [1, 0], sizes = [1, 128], strides = [1, 1]} : vector<2x128xf32> to vector<1x128xf32>
    %76 = vector.broadcast %75 : vector<1x128xf32> to vector<2x128xf32>
    %77 = arith.addf %74, %76 : vector<2x128xf32>
    %78 = arith.addf %73, %77 : vector<2x128xf32>
    %79 = vector.extract_strided_slice %78 {offsets = [0, 0], sizes = [2, 32], strides = [1, 1]} : vector<2x128xf32> to vector<2x32xf32>
    %80 = arith.negf %79 : vector<2x32xf32>
    %81 = math.exp %80 : vector<2x32xf32>
    %cst_30 = arith.constant 1.000000e+00 : f32
    %82 = vector.broadcast %cst_30 : f32 to vector<2x32xf32>
    %83 = arith.addf %82, %81 : vector<2x32xf32>
    %84 = arith.divf %82, %83 : vector<2x32xf32>
    %85 = vector.extract_strided_slice %78 {offsets = [0, 32], sizes = [2, 32], strides = [1, 1]} : vector<2x128xf32> to vector<2x32xf32>
    %86 = arith.negf %85 : vector<2x32xf32>
    %87 = math.exp %86 : vector<2x32xf32>
    %cst_31 = arith.constant 1.000000e+00 : f32
    %88 = vector.broadcast %cst_31 : f32 to vector<2x32xf32>
    %89 = arith.addf %88, %87 : vector<2x32xf32>
    %90 = arith.divf %88, %89 : vector<2x32xf32>
    %91 = vector.extract_strided_slice %73 {offsets = [0, 64], sizes = [2, 32], strides = [1, 1]} : vector<2x128xf32> to vector<2x32xf32>
    %92 = vector.extract_strided_slice %77 {offsets = [0, 64], sizes = [2, 32], strides = [1, 1]} : vector<2x128xf32> to vector<2x32xf32>
    %93 = arith.mulf %84, %92 : vector<2x32xf32>
    %94 = arith.addf %91, %93 : vector<2x32xf32>
    %95 = math.tanh %94 : vector<2x32xf32>
    %cst_32 = arith.constant 1.000000e+00 : f32
    %96 = vector.broadcast %cst_32 : f32 to vector<2x32xf32>
    %97 = arith.subf %96, %90 : vector<2x32xf32>
    %98 = arith.mulf %97, %95 : vector<2x32xf32>
    %99 = arith.mulf %90, %69 : vector<2x32xf32>
    %100 = arith.addf %98, %99 : vector<2x32xf32>
    %c0_33 = arith.constant 0 : index
    %c0_34 = arith.constant 0 : index
    %c0_35 = arith.constant 0 : index
    %101 = vector.load %arg4[%c0_33, %c0_34, %c0_35] : memref<2x2x32xf32, #tpu.memory_space<vmem>>, vector<1x2x32xf32>
    %102 = vector.shape_cast %101 : vector<1x2x32xf32> to vector<2x32xf32>
    %103 = vector.shape_cast %100 : vector<2x32xf32> to vector<1x2x32xf32>
    tpu.vector_store %arg4[%c0_33, %c0_34, %c0_35], %103 {strides = array<i32>} : memref<2x2x32xf32, #tpu.memory_space<vmem>>, vector<1x2x32xf32>,
    %c112 = arith.constant 112 : index
    %c0_36 = arith.constant 0 : index
    %104 = vector.load %arg0[%c112, %c0_36] : memref<224x128xf32, #tpu.memory_space<vmem>>, vector<32x128xf32>
    %c144 = arith.constant 144 : index
    %c0_37 = arith.constant 0 : index
    %105 = vector.load %arg0[%c144, %c0_37] : memref<224x128xf32, #tpu.memory_space<vmem>>, vector<32x128xf32>
    %c176 = arith.constant 176 : index
    %c0_38 = arith.constant 0 : index
    %106 = vector.load %arg0[%c176, %c0_38] : memref<224x128xf32, #tpu.memory_space<vmem>>, vector<2x128xf32>
    %c1_39 = arith.constant 1 : index
    %c0_40 = arith.constant 0 : index
    %c0_41 = arith.constant 0 : index
    %107 = vector.load %arg2[%c1_39, %c0_40, %c0_41] : memref<2x2x32xf32, #tpu.memory_space<vmem>>, vector<1x2x32xf32>
    %108 = vector.shape_cast %107 : vector<1x2x32xf32> to vector<2x32xf32>
    %cst_42 = arith.constant dense<0.000000e+00> : vector<2x128xf32>
    %109 = tpu.matmul %100, %104, %cst_42 {dimension_numbers = #tpu.dot_dimension_numbers<[1], [0], [0], [1], [0, 0, 1, 1], [], []>} : vector<2x32xf32>, vector<32x128xf32>, vector<2x128xf32> -> vector<2x128xf32>
    %110 = vector.extract_strided_slice %106 {offsets = [0, 0], sizes = [1, 128], strides = [1, 1]} : vector<2x128xf32> to vector<1x128xf32>
    %111 = vector.broadcast %110 : vector<1x128xf32> to vector<2x128xf32>
    %112 = arith.addf %109, %111 : vector<2x128xf32>
    %cst_43 = arith.constant dense<0.000000e+00> : vector<2x128xf32>
    %113 = tpu.matmul %108, %105, %cst_43 {dimension_numbers = #tpu.dot_dimension_numbers<[1], [0], [0], [1], [0, 0, 1, 1], [], []>} : vector<2x32xf32>, vector<32x128xf32>, vector<2x128xf32> -> vector<2x128xf32>
    %114 = vector.extract_strided_slice %106 {offsets = [1, 0], sizes = [1, 128], strides = [1, 1]} : vector<2x128xf32> to vector<1x128xf32>
    %115 = vector.broadcast %114 : vector<1x128xf32> to vector<2x128xf32>
    %116 = arith.addf %113, %115 : vector<2x128xf32>
    %117 = arith.addf %112, %116 : vector<2x128xf32>
    %118 = vector.extract_strided_slice %117 {offsets = [0, 0], sizes = [2, 32], strides = [1, 1]} : vector<2x128xf32> to vector<2x32xf32>
    %119 = arith.negf %118 : vector<2x32xf32>
    %120 = math.exp %119 : vector<2x32xf32>
    %cst_44 = arith.constant 1.000000e+00 : f32
    %121 = vector.broadcast %cst_44 : f32 to vector<2x32xf32>
    %122 = arith.addf %121, %120 : vector<2x32xf32>
    %123 = arith.divf %121, %122 : vector<2x32xf32>
    %124 = vector.extract_strided_slice %117 {offsets = [0, 32], sizes = [2, 32], strides = [1, 1]} : vector<2x128xf32> to vector<2x32xf32>
    %125 = arith.negf %124 : vector<2x32xf32>
    %126 = math.exp %125 : vector<2x32xf32>
    %cst_45 = arith.constant 1.000000e+00 : f32
    %127 = vector.broadcast %cst_45 : f32 to vector<2x32xf32>
    %128 = arith.addf %127, %126 : vector<2x32xf32>
    %129 = arith.divf %127, %128 : vector<2x32xf32>
    %130 = vector.extract_strided_slice %112 {offsets = [0, 64], sizes = [2, 32], strides = [1, 1]} : vector<2x128xf32> to vector<2x32xf32>
    %131 = vector.extract_strided_slice %116 {offsets = [0, 64], sizes = [2, 32], strides = [1, 1]} : vector<2x128xf32> to vector<2x32xf32>
    %132 = arith.mulf %123, %131 : vector<2x32xf32>
    %133 = arith.addf %130, %132 : vector<2x32xf32>
    %134 = math.tanh %133 : vector<2x32xf32>
    %cst_46 = arith.constant 1.000000e+00 : f32
    %135 = vector.broadcast %cst_46 : f32 to vector<2x32xf32>
    %136 = arith.subf %135, %129 : vector<2x32xf32>
    %137 = arith.mulf %136, %134 : vector<2x32xf32>
    %138 = arith.mulf %129, %108 : vector<2x32xf32>
    %139 = arith.addf %137, %138 : vector<2x32xf32>
    %c1_47 = arith.constant 1 : index
    %c0_48 = arith.constant 0 : index
    %c0_49 = arith.constant 0 : index
    %140 = vector.load %arg4[%c1_47, %c0_48, %c0_49] : memref<2x2x32xf32, #tpu.memory_space<vmem>>, vector<1x2x32xf32>
    %141 = vector.shape_cast %140 : vector<1x2x32xf32> to vector<2x32xf32>
    %142 = vector.shape_cast %139 : vector<2x32xf32> to vector<1x2x32xf32>
    tpu.vector_store %arg4[%c1_47, %c0_48, %c0_49], %142 {strides = array<i32>} : memref<2x2x32xf32, #tpu.memory_space<vmem>>, vector<1x2x32xf32>,
    %c184 = arith.constant 184 : index
    %c0_50 = arith.constant 0 : index
    %143 = vector.load %arg0[%c184, %c0_50] : memref<224x128xf32, #tpu.memory_space<vmem>>, vector<32x128xf32>
    %cst_51 = arith.constant dense<0.000000e+00> : vector<2x128xf32>
    %144 = tpu.matmul %139, %143, %cst_51 {dimension_numbers = #tpu.dot_dimension_numbers<[1], [0], [0], [1], [0, 0, 1, 1], [], []>} : vector<2x32xf32>, vector<32x128xf32>, vector<2x128xf32> -> vector<2x128xf32>
    %c216 = arith.constant 216 : index
    %c0_52 = arith.constant 0 : index
    %145 = vector.load %arg0[%c216, %c0_52] : memref<224x128xf32, #tpu.memory_space<vmem>>, vector<1x128xf32>
    %146 = vector.broadcast %145 : vector<1x128xf32> to vector<2x128xf32>
    %147 = arith.addf %144, %146 : vector<2x128xf32>
    %148 = vector.extract_strided_slice %147 {offsets = [0, 0], sizes = [2, 32], strides = [1, 1]} : vector<2x128xf32> to vector<2x32xf32>
    %c0_53 = arith.constant 0 : index
    %c0_54 = arith.constant 0 : index
    %149 = vector.load %arg3[%c0_53, %c0_54] : memref<2x32xf32, #tpu.memory_space<vmem>>, vector<2x32xf32>
    tpu.vector_store %arg3[%c0_53, %c0_54], %148 {strides = array<i32>} : memref<2x32xf32, #tpu.memory_space<vmem>>, vector<2x32xf32>,
    return
  }
}

</mosaic_0001>

<llo_original>
// kernel: forward.1
$region0: #{forward.1}
  #allocation0 [shape = 'u32[]', space=smem, size = 0x4, offset = 0x4, fixed_abs, tag = 'smem constant byte address 0x4 - core index']
  #allocation1 [shape = 'u32[144,128]{1,0:T(1,128)}', space=vmem, size = 0x12000, scoped, tag = 'internal scratch']
  %s0 = inlined_call_operand.hbm [shape: f32[224,128], index: 0, kind: input, shape index: {}]
  %s1 = inlined_call_operand.vmem [shape: f32[12,16], index: 1, kind: input, shape index: {}]
  %s2 = inlined_call_operand.hbm [shape: f32[2,2,32], index: 2, kind: input, shape index: {}, may-alias: {2,4}]
  %s3 = inlined_call_operand.hbm [shape: f32[2,32], index: 3, kind: output, shape index: {0}]
  %s4 = inlined_call_operand.hbm [shape: f32[2,2,32], index: 4, kind: output, shape index: {1}, may-alias: {2,4}]
  %5 = xla_tuple %s3, %s4
  %s6 = sld [smem:[#allocation0]]
  $region38: #{forward.1} parent=0
    _
  %s8 = ssub.s32 1, %s6
  %s9 = scalar_select 0, %s8, %s6
  $region1: #{forward.1} parent=0
    #allocation2 [shape = 'u8[114688]{0}', space=vmem, size = 0x1c000, scoped, tag = 'input window, operand 0, single buffered']
    #allocation3 [shape = 's32[1]{0}', space=sflag, size = 0x4, scoped, tag = 'scoped memory for forward.1']
    #allocation4 [shape = 's32[1]{0}', space=sflag, size = 0x4, scoped, tag = 'scoped memory for forward.1']
    #allocation5 [shape = 'u8[2048]{0}', space=vmem, size = 0x800, scoped, tag = 'input window, operand 2, single buffered']
    #allocation6 [shape = 's32[1]{0}', space=sflag, size = 0x4, scoped, tag = 'scoped memory for forward.1']
    #allocation7 [shape = 'u8[1024]{0}', space=vmem, size = 0x400, scoped, tag = 'output window, operand 0, single buffered']
    #allocation8 [shape = 'u8[2048]{0}', space=vmem, size = 0x800, scoped, tag = 'output window, operand 1, single buffered']
    #allocation9 [shape = 's32[1]{0}', space=sflag, size = 0x4, scoped, tag = 'scoped memory for forward.1']
    %10 = vsyncpa [#allocation3], 0
    %11 = vsyncpa [#allocation6], 0
    %12 = vsyncpa [#allocation4], 0
    %13 = vsyncpa [#allocation9], 0
    // Predicated region
    $region2: #{forward.1} parent=1 // pred_check
      _
    $region3: #{forward.1} parent=1 // pred_check_branch
      %15 = sbr.rel (0) target = $region5
    $region4: #{forward.1} parent=1 // pred_region
      %s17 = ssub.s32 3584, 3584
      %18 = vsyncadd [#allocation3], %s17
      %s19 = sshll.u32 [#allocation2], 4
      %s20 = int_to_ptr.vmem [resolvable:$true] %s19
      %25 = dma.hbm_to_vmem [thread:$0]  %s0, 3584, %s20, [#allocation3], 128, 128, 8
    $region5: #{forward.1} parent=1 // pred_fallthru
      _
    // Predicated region
    $region6: #{forward.1} parent=1 // pred_check
      _
    $region7: #{forward.1} parent=1 // pred_check_branch
      %27 = sbr.rel (0) target = $region9
    $region8: #{forward.1} parent=1 // pred_region
      _
    $region9: #{forward.1} parent=1 // pred_fallthru
      _
    // Predicated region
    $region10: #{forward.1} parent=1 // pred_check
      _
    $region11: #{forward.1} parent=1 // pred_check_branch
      %29 = sbr.rel (0) target = $region13
    $region12: #{forward.1} parent=1 // pred_region
      %s31 = ssub.s32 64, 64
      %32 = vsyncadd [#allocation6], %s31
      %s33 = sshll.u32 [#allocation5], 4
      %s34 = int_to_ptr.vmem [resolvable:$true] %s33
      %39 = dma.hbm_to_vmem [thread:$0]  %s2, 64, %s34, [#allocation6], 32, 32, 2
    $region13: #{forward.1} parent=1 // pred_fallthru
      _
    // Predicated region
    $region14: #{forward.1} parent=1 // pred_check
      _
    $region15: #{forward.1} parent=1 // pred_check_branch
      %41 = sbr.rel (0) target = $region17
    $region16: #{forward.1} parent=1 // pred_region
      %42 = dma.done [#allocation3], 3584
    $region17: #{forward.1} parent=1 // pred_fallthru
      _
    // Predicated region
    $region18: #{forward.1} parent=1 // pred_check
      _
    $region19: #{forward.1} parent=1 // pred_check_branch
      %44 = sbr.rel (0) target = $region21
    $region20: #{forward.1} parent=1 // pred_region
      %45 = dma.done [#allocation6], 64
    $region21: #{forward.1} parent=1 // pred_fallthru
      _
    %v46 = vld [vmem:[%s1] sm:$0xff]
    %v47 = vld [vmem:[%s1 + $0x8] sm:$0xf]
    %s48 = scalar_lea.vmem [#allocation5], 2
    %v49 = vld [vmem:[%s48] sm:$0x3]
    %v50 = vld [vmem:[#allocation2] sm:$0xff]
    %v51 = vld [vmem:[#allocation2 + $0x8] sm:$0xff]
    %v52 = vld [vmem:[#allocation2 + $0x10] sm:$0xff]
    %v53 = vld [vmem:[#allocation2 + $0x18] sm:$0xff]
    %vm54 = vcmask 261120
    %v56 = vsel %vm54, %v49, 0
    %58 = vmatprep.subr.mxu0 0.0
    %59 = vmatpush1.msra.mxu0 0.0
    %60 = vmatprep.subr.mxu0 0.0
    %61 = vmatpush1.msra.mxu0 0.0
    %62 = vmatprep.subr.mxu0 0.0
    %63 = vmatpush1.msra.mxu0 0.0
    %64 = vmatprep.subr.mxu0 0.0
    %65 = vmatpush1.msra.mxu0 0.0
    %66 = vmatprep.subr.mxu0 0.0
    %67 = vmatpush1.msra.mxu0 0.0
    %68 = vmatprep.subr.mxu0 0.0
    %69 = vmatpush1.msra.mxu0 0.0
    %70 = vmatprep.subr.mxu0 0.0
    %71 = vmatpush1.msra.mxu0 0.0
    %72 = vmatprep.subr.mxu0 0.0
    %73 = vmatpush1.msra.mxu0 0.0
    %74 = vmatprep.subr.mxu0 0.0
    %75 = vmatpush1.msra.mxu0 0.0
    %76 = vmatprep.subr.mxu0 0.0
    %77 = vmatpush1.msra.mxu0 0.0
    %78 = vmatprep.subr.mxu0 0.0
    %79 = vmatpush1.msra.mxu0 0.0
    %80 = vmatprep.subr.mxu0 0.0
    %81 = vmatpush1.msra.mxu0 0.0
    %82 = vmatprep.subr.mxu0 0.0
    %83 = vmatpush1.msra.mxu0 %v53
    %84 = vmatprep.subr.mxu0 0.0
    %85 = vmatpush1.msra.mxu0 %v52
    %86 = vmatprep.subr.mxu0 0.0
    %87 = vmatpush1.msra.mxu0 %v51
    %88 = vmatprep.subr.mxu0 0.0
    %89 = vmatpush1.msra.mxu0 %v50
    %90 = vmatprep.subr.mxu0 0.0
    %91 = vmatpush2.msra.mxu0 0.0
    %92 = vmatprep.subr.mxu0 0.0
    %93 = vmatpush2.msra.mxu0 0.0
    %94 = vmatprep.subr.mxu0 0.0
    %95 = vmatpush2.msra.mxu0 0.0
    %96 = vmatprep.subr.mxu0 0.0
    %97 = vmatpush2.msra.mxu0 0.0
    %98 = vmatprep.subr.mxu0 0.0
    %99 = vmatpush2.msra.mxu0 0.0
    %100 = vmatprep.subr.mxu0 0.0
    %101 = vmatpush2.msra.mxu0 0.0
    %102 = vmatprep.subr.mxu0 0.0
    %103 = vmatpush2.msra.mxu0 0.0
    %104 = vmatprep.subr.mxu0 0.0
    %105 = vmatpush2.msra.mxu0 0.0
    %106 = vmatprep.subr.mxu0 0.0
    %107 = vmatpush2.msra.mxu0 0.0
    %108 = vmatprep.subr.mxu0 0.0
    %109 = vmatpush2.msra.mxu0 0.0
    %110 = vmatprep.subr.mxu0 0.0
    %111 = vmatpush2.msra.mxu0 0.0
    %112 = vmatprep.subr.mxu0 0.0
    %113 = vmatpush2.msra.mxu0 0.0
    %114 = vmatprep.subr.mxu0 0.0
    %115 = vmatpush2.msra.mxu0 0.0
    %116 = vmatprep.subr.mxu0 0.0
    %117 = vmatpush2.msra.mxu0 0.0
    %118 = vmatprep.subr.mxu0 0.0
    %119 = vmatpush2.msra.mxu0 0.0
    %120 = vmatprep.subr.mxu0 0.0
    %121 = vmatpush2.msra.mxu0 0.0
    %122 = vmatprep.mubr.f32.mxu0 0.0
    %123 = vmatmul.mubr.f32.gmra.mxu0 %v56
    %v124 = vpop.f32.mrf.mxu0
    %v125 = vadd.f32 0.0, %v124
    %v126 = vpop.f32.mrf.mxu0
    %127 = vdwg.mxu0
    %v128 = vlaneseq
    %v129 = vshrl.u32 %v128, 7
    %v130 = vadd.s32 %v129, 8
    %v131 = vlaneseq
    %v132 = vand.u32 %v131, 127
    %vm133 = vcmp.lt.s32.totalorder %v129, 0
    %v134 = vsub.s32 0, %v129
    %v135 = vsel %vm133, %v134, %v129
    %v136 = vshrl.u32 %v135, 1
    %v137 = vand.u32 %v135, 1
    %v138 = vsub.s32 0, %v137
    %v139 = vsel %vm133, %v138, %v137
    %vm140 = vcmp.lt.s32.totalorder %v130, 0
    %v141 = vsub.s32 0, %v130
    %v142 = vsel %vm140, %v141, %v130
    %v143 = vshrl.u32 %v142, 1
    %v144 = vand.u32 %v142, 1
    %v145 = vsub.s32 0, %v144
    %v146 = vsel %vm140, %v145, %v144
    %vm147 = vcmp.ne.s32.totalorder %v139, 0
    %vm148 = vcmp.ne.s32.totalorder %v146, 0
    %vm149 = vcmp.lt.s32.totalorder %v139, 0
    %vm150 = vcmp.lt.s32.totalorder %v146, 0
    %vm151 = vmand %vm149, %vm147
    %vm152 = vmand %vm150, %vm148
    %v153 = vadd.s32 %v139, 2
    %v154 = vadd.s32 %v146, 2
    %v155 = vsel %vm151, %v153, %v139
    %v156 = vsel %vm152, %v154, %v146
    %vm157 = vcmp.eq.s32.totalorder %v155, %v132
    %vm158 = vcmp.eq.s32.totalorder %v156, %v132
    %v159 = vsel %vm157, 1, 0
    %v160 = vsel %vm158, 1, 0
    %v161 = vcvt.s32.f32 %v159
    %v162 = vcvt.s32.f32 %v160
    %v163 = vld [vmem:[#allocation2 + $0x20] sm:$0xff]
    %v164 = vld [vmem:[#allocation2 + $0x28] sm:$0xff]
    %vm165 = vcmask 130048
    %v167 = vsel %vm165, %v46, 0
    %v170 = vsel %vm165, %v47, 0
    %172 = vmatprep.subr.mxu0 0.0
    %173 = vmatpush1.msra.mxu0 0.0
    %174 = vmatprep.subr.mxu0 0.0
    %175 = vmatpush1.msra.mxu0 0.0
    %176 = vmatprep.subr.mxu0 0.0
    %177 = vmatpush1.msra.mxu0 0.0
    %178 = vmatprep.subr.mxu0 0.0
    %179 = vmatpush1.msra.mxu0 0.0
    %180 = vmatprep.subr.mxu0 0.0
    %181 = vmatpush1.msra.mxu0 0.0
    %182 = vmatprep.subr.mxu0 0.0
    %183 = vmatpush1.msra.mxu0 0.0
    %184 = vmatprep.subr.mxu0 0.0
    %185 = vmatpush1.msra.mxu0 0.0
    %186 = vmatprep.subr.mxu0 0.0
    %187 = vmatpush1.msra.mxu0 0.0
    %188 = vmatprep.subr.mxu0 0.0
    %189 = vmatpush1.msra.mxu0 0.0
    %190 = vmatprep.subr.mxu0 0.0
    %191 = vmatpush1.msra.mxu0 0.0
    %192 = vmatprep.subr.mxu0 0.0
    %193 = vmatpush1.msra.mxu0 0.0
    %194 = vmatprep.subr.mxu0 0.0
    %195 = vmatpush1.msra.mxu0 0.0
    %196 = vmatprep.subr.mxu0 0.0
    %197 = vmatpush1.msra.mxu0 0.0
    %198 = vmatprep.subr.mxu0 0.0
    %199 = vmatpush1.msra.mxu0 0.0
    %200 = vmatprep.subr.mxu0 0.0
    %201 = vmatpush1.msra.mxu0 %v164
    %202 = vmatprep.subr.mxu0 0.0
    %203 = vmatpush1.msra.mxu0 %v163
    %204 = vmatprep.subr.mxu0 0.0
    %205 = vmatpush2.msra.mxu0 0.0
    %206 = vmatprep.subr.mxu0 0.0
    %207 = vmatpush2.msra.mxu0 0.0
    %208 = vmatprep.subr.mxu0 0.0
    %209 = vmatpush2.msra.mxu0 0.0
    %210 = vmatprep.subr.mxu0 0.0
    %211 = vmatpush2.msra.mxu0 0.0
    %212 = vmatprep.subr.mxu0 0.0
    %213 = vmatpush2.msra.mxu0 0.0
    %214 = vmatprep.subr.mxu0 0.0
    %215 = vmatpush2.msra.mxu0 0.0
    %216 = vmatprep.subr.mxu0 0.0
    %217 = vmatpush2.msra.mxu0 0.0
    %218 = vmatprep.subr.mxu0 0.0
    %219 = vmatpush2.msra.mxu0 0.0
    %220 = vmatprep.subr.mxu0 0.0
    %221 = vmatpush2.msra.mxu0 0.0
    %222 = vmatprep.subr.mxu0 0.0
    %223 = vmatpush2.msra.mxu0 0.0
    %224 = vmatprep.subr.mxu0 0.0
    %225 = vmatpush2.msra.mxu0 0.0
    %226 = vmatprep.subr.mxu0 0.0
    %227 = vmatpush2.msra.mxu0 0.0
    %228 = vmatprep.subr.mxu0 0.0
    %229 = vmatpush2.msra.mxu0 0.0
    %230 = vmatprep.subr.mxu0 0.0
    %231 = vmatpush2.msra.mxu0 0.0
    %232 = vmatprep.subr.mxu0 0.0
    %233 = vmatpush2.msra.mxu0 0.0
    %234 = vmatprep.subr.mxu0 0.0
    %235 = vmatpush2.msra.mxu0 0.0
    %236 = vmatprep.mubr.f32.mxu0 0.0
    %237 = vmatmul.mubr.f32.gmra.mxu0 %v167
    %v238 = vpop.f32.mrf.mxu0
    %v239 = vadd.f32 0.0, %v238
    %v240 = vpop.f32.mrf.mxu0
    %241 = vmatprep.mubr.f32.mxu0 0.0
    %242 = vmatmul.mubr.f32.gmra.mxu0 %v170
    %v243 = vpop.f32.mrf.mxu0
    %v244 = vadd.f32 0.0, %v243
    %v245 = vpop.f32.mrf.mxu0
    %246 = vdwg.mxu0
    %v247 = vld [vmem:[#allocation2 + $0x30] sm:$0x3]
    %vm248 = vcmask 15360
    %v250 = vsel %vm248, %v161, 0
    %v253 = vsel %vm248, %v162, 0
    %vm255 = vcmask 1041408
    %v257 = vsel %vm255, %v125, 0
    %259 = vmatprep.subr.mxu0 0.0
    %260 = vmatpush1.msra.mxu0 0.0
    %261 = vmatprep.subr.mxu0 0.0
    %262 = vmatpush1.msra.mxu0 0.0
    %263 = vmatprep.subr.mxu0 0.0
    %264 = vmatpush1.msra.mxu0 0.0
    %265 = vmatprep.subr.mxu0 0.0
    %266 = vmatpush1.msra.mxu0 0.0
    %267 = vmatprep.subr.mxu0 0.0
    %268 = vmatpush1.msra.mxu0 0.0
    %269 = vmatprep.subr.mxu0 0.0
    %270 = vmatpush1.msra.mxu0 0.0
    %271 = vmatprep.subr.mxu0 0.0
    %272 = vmatpush1.msra.mxu0 0.0
    %273 = vmatprep.subr.mxu0 0.0
    %274 = vmatpush1.msra.mxu0 0.0
    %275 = vmatprep.subr.mxu0 0.0
    %276 = vmatpush1.msra.mxu0 0.0
    %277 = vmatprep.subr.mxu0 0.0
    %278 = vmatpush1.msra.mxu0 0.0
    %279 = vmatprep.subr.mxu0 0.0
    %280 = vmatpush1.msra.mxu0 0.0
    %281 = vmatprep.subr.mxu0 0.0
    %282 = vmatpush1.msra.mxu0 0.0
    %283 = vmatprep.subr.mxu0 0.0
    %284 = vmatpush1.msra.mxu0 0.0
    %285 = vmatprep.subr.mxu0 0.0
    %286 = vmatpush1.msra.mxu0 0.0
    %287 = vmatprep.subr.mxu0 0.0
    %288 = vmatpush1.msra.mxu0 0.0
    %289 = vmatprep.subr.mxu0 0.0
    %290 = vmatpush1.msra.mxu0 %v257
    %291 = vmatprep.subr.mxu0 0.0
    %292 = vmatpush2.msra.mxu0 0.0
    %293 = vmatprep.subr.mxu0 0.0
    %294 = vmatpush2.msra.mxu0 0.0
    %295 = vmatprep.subr.mxu0 0.0
    %296 = vmatpush2.msra.mxu0 0.0
    %297 = vmatprep.subr.mxu0 0.0
    %298 = vmatpush2.msra.mxu0 0.0
    %299 = vmatprep.subr.mxu0 0.0
    %300 = vmatpush2.msra.mxu0 0.0
    %301 = vmatprep.subr.mxu0 0.0
    %302 = vmatpush2.msra.mxu0 0.0
    %303 = vmatprep.subr.mxu0 0.0
    %304 = vmatpush2.msra.mxu0 0.0
    %305 = vmatprep.subr.mxu0 0.0
    %306 = vmatpush2.msra.mxu0 0.0
    %307 = vmatprep.subr.mxu0 0.0
    %308 = vmatpush2.msra.mxu0 0.0
    %309 = vmatprep.subr.mxu0 0.0
    %310 = vmatpush2.msra.mxu0 0.0
    %311 = vmatprep.subr.mxu0 0.0
    %312 = vmatpush2.msra.mxu0 0.0
    %313 = vmatprep.subr.mxu0 0.0
    %314 = vmatpush2.msra.mxu0 0.0
    %315 = vmatprep.subr.mxu0 0.0
    %316 = vmatpush2.msra.mxu0 0.0
    %317 = vmatprep.subr.mxu0 0.0
    %318 = vmatpush2.msra.mxu0 0.0
    %319 = vmatprep.subr.mxu0 0.0
    %320 = vmatpush2.msra.mxu0 0.0
    %321 = vmatprep.subr.mxu0 0.0
    %322 = vmatpush2.msra.mxu0 0.0
    %323 = vmatprep.mubr.f32.mxu0 0.0
    %324 = vmatmul.mubr.f32.gmra.mxu0 %v250
    %v325 = vpop.f32.mrf.mxu0
    %v326 = vadd.f32 %v239, %v325
    %v327 = vpop.f32.mrf.mxu0
    %328 = vmatprep.mubr.f32.mxu0 0.0
    %329 = vmatmul.mubr.f32.gmra.mxu0 %v253
    %v330 = vpop.f32.mrf.mxu0
    %v331 = vadd.f32 %v244, %v330
    %v332 = vpop.f32.mrf.mxu0
    %333 = vdwg.mxu0
    %v334 = vlaneseq
    %v335 = vshrl.u32 %v334, 7
    %v336 = vsub.s32 0, %v335
    %v337 = vrot.slane %v247, %v336
    %v338 = vadd.f32 %v326, %v337
    %v339 = vadd.f32 %v331, %v337
    %v340 = vtanh.pop %v338
    %v341 = vtanh.pop %v339
    %v342 = vlaneseq
    %v343 = vshrl.u32 %v342, 7
    %v344 = vsub.s32 1, %v343
    %v345 = vrot.slane %v247, %v344
    %v346 = vmul.f32 %v340, %v345
    %v347 = vmul.f32 %v341, %v345
    %348 = vadd.xlane.f32.xlu0 %v346
    %v349 = vpop.xlane.xlu0 %348
    %vm350 = vcmask 1043456
    %v351 = vsel %vm350, %v347, 0.0
    %352 = vadd.xlane.f32.xlu0 %v351
    %v353 = vpop.xlane.xlu0 %352
    %v354 = vmul.f32 %v349, %v46
    %v355 = vmul.f32 %v353, %v47
    %vm356 = vcmp.lt.s32.totalorder %v132, 0
    %v357 = vsub.s32 0, %v132
    %v358 = vsel %vm356, %v357, %v132
    %v359 = vshrl.u32 %v358, 1
    %v360 = vand.u32 %v358, 1
    %v361 = vsub.s32 0, %v360
    %v362 = vsel %vm356, %v361, %v360
    %vm363 = vcmp.ne.s32.totalorder %v362, 0
    %vm364 = vcmp.lt.s32.totalorder %v362, 0
    %vm365 = vmand %vm364, %vm363
    %v366 = vadd.s32 %v362, 2
    %v367 = vsel %vm365, %v366, %v362
    %vm368 = vcmp.eq.s32.totalorder %v367, %v129
    %v369 = vsel %vm368, 0.16666667, 0.0
    %vm370 = vcmask 97280
    %v372 = vsel %vm370, %v369, 0
    %v375 = vsel %vm350, %v355, 0
    %377 = vmatprep.subr.mxu0 0.0
    %378 = vmatpush1.msra.mxu0 0.0
    %379 = vmatprep.subr.mxu0 0.0
    %380 = vmatpush1.msra.mxu0 0.0
    %381 = vmatprep.subr.mxu0 0.0
    %382 = vmatpush1.msra.mxu0 0.0
    %383 = vmatprep.subr.mxu0 0.0
    %384 = vmatpush1.msra.mxu0 0.0
    %385 = vmatprep.subr.mxu0 0.0
    %386 = vmatpush1.msra.mxu0 0.0
    %387 = vmatprep.subr.mxu0 0.0
    %388 = vmatpush1.msra.mxu0 0.0
    %389 = vmatprep.subr.mxu0 0.0
    %390 = vmatpush1.msra.mxu0 0.0
    %391 = vmatprep.subr.mxu0 0.0
    %392 = vmatpush1.msra.mxu0 0.0
    %393 = vmatprep.subr.mxu0 0.0
    %394 = vmatpush1.msra.mxu0 0.0
    %395 = vmatprep.subr.mxu0 0.0
    %396 = vmatpush1.msra.mxu0 0.0
    %397 = vmatprep.subr.mxu0 0.0
    %398 = vmatpush1.msra.mxu0 0.0
    %399 = vmatprep.subr.mxu0 0.0
    %400 = vmatpush1.msra.mxu0 0.0
    %401 = vmatprep.subr.mxu0 0.0
    %402 = vmatpush1.msra.mxu0 0.0
    %403 = vmatprep.subr.mxu0 0.0
    %404 = vmatpush1.msra.mxu0 0.0
    %405 = vmatprep.subr.mxu0 0.0
    %406 = vmatpush1.msra.mxu0 %v375
    %407 = vmatprep.subr.mxu0 0.0
    %408 = vmatpush1.msra.mxu0 %v354
    %409 = vmatprep.subr.mxu0 0.0
    %410 = vmatpush2.msra.mxu0 0.0
    %411 = vmatprep.subr.mxu0 0.0
    %412 = vmatpush2.msra.mxu0 0.0
    %413 = vmatprep.subr.mxu0 0.0
    %414 = vmatpush2.msra.mxu0 0.0
    %415 = vmatprep.subr.mxu0 0.0
    %416 = vmatpush2.msra.mxu0 0.0
    %417 = vmatprep.subr.mxu0 0.0
    %418 = vmatpush2.msra.mxu0 0.0
    %419 = vmatprep.subr.mxu0 0.0
    %420 = vmatpush2.msra.mxu0 0.0
    %421 = vmatprep.subr.mxu0 0.0
    %422 = vmatpush2.msra.mxu0 0.0
    %423 = vmatprep.subr.mxu0 0.0
    %424 = vmatpush2.msra.mxu0 0.0
    %425 = vmatprep.subr.mxu0 0.0
    %426 = vmatpush2.msra.mxu0 0.0
    %427 = vmatprep.subr.mxu0 0.0
    %428 = vmatpush2.msra.mxu0 0.0
    %429 = vmatprep.subr.mxu0 0.0
    %430 = vmatpush2.msra.mxu0 0.0
    %431 = vmatprep.subr.mxu0 0.0
    %432 = vmatpush2.msra.mxu0 0.0
    %433 = vmatprep.subr.mxu0 0.0
    %434 = vmatpush2.msra.mxu0 0.0
    %435 = vmatprep.subr.mxu0 0.0
    %436 = vmatpush2.msra.mxu0 0.0
    %437 = vmatprep.subr.mxu0 0.0
    %438 = vmatpush2.msra.mxu0 0.0
    %439 = vmatprep.subr.mxu0 0.0
    %440 = vmatpush2.msra.mxu0 0.0
    %441 = vmatprep.mubr.f32.mxu0 0.0
    %442 = vmatmul.mubr.f32.gmra.mxu0 %v372
    %v443 = vpop.f32.mrf.mxu0
    %v444 = vadd.f32 0.0, %v443
    %v445 = vpop.f32.mrf.mxu0
    %446 = vdwg.mxu0
    %v447 = vld [vmem:[#allocation2 + $0x38] sm:$0xff]
    %v448 = vld [vmem:[#allocation2 + $0x40] sm:$0xff]
    %v449 = vld [vmem:[#allocation2 + $0x48] sm:$0xff]
    %v450 = vld [vmem:[#allocation2 + $0x50] sm:$0xff]
    %v451 = vld [vmem:[#allocation2 + $0x58] sm:$0xff]
    %v452 = vld [vmem:[#allocation2 + $0x60] sm:$0xff]
    %v453 = vld [vmem:[#allocation2 + $0x68] sm:$0x3]
    %v454 = vld [vmem:[#allocation5] sm:$0x3]
    %v455 = vlaneseq
    %v456 = vshrl.u32 %v455, 7
    %v457 = vsub.s32 0, %v456
    %v458 = vrot.slane %v453, %v457
    %v460 = vsel %vm165, %v444, 0
    %462 = vmatprep.subr.mxu0 0.0
    %463 = vmatpush1.msra.mxu0 0.0
    %464 = vmatprep.subr.mxu0 0.0
    %465 = vmatpush1.msra.mxu0 0.0
    %466 = vmatprep.subr.mxu0 0.0
    %467 = vmatpush1.msra.mxu0 0.0
    %468 = vmatprep.subr.mxu0 0.0
    %469 = vmatpush1.msra.mxu0 0.0
    %470 = vmatprep.subr.mxu0 0.0
    %471 = vmatpush1.msra.mxu0 0.0
    %472 = vmatprep.subr.mxu0 0.0
    %473 = vmatpush1.msra.mxu0 0.0
    %474 = vmatprep.subr.mxu0 0.0
    %475 = vmatpush1.msra.mxu0 0.0
    %476 = vmatprep.subr.mxu0 0.0
    %477 = vmatpush1.msra.mxu0 0.0
    %478 = vmatprep.subr.mxu0 0.0
    %479 = vmatpush1.msra.mxu0 0.0
    %480 = vmatprep.subr.mxu0 0.0
    %481 = vmatpush1.msra.mxu0 0.0
    %482 = vmatprep.subr.mxu0 0.0
    %483 = vmatpush1.msra.mxu0 0.0
    %484 = vmatprep.subr.mxu0 0.0
    %485 = vmatpush1.msra.mxu0 0.0
    %486 = vmatprep.subr.mxu0 0.0
    %487 = vmatpush1.msra.mxu0 0.0
    %488 = vmatprep.subr.mxu0 0.0
    %489 = vmatpush1.msra.mxu0 0.0
    %490 = vmatprep.subr.mxu0 0.0
    %491 = vmatpush1.msra.mxu0 %v448
    %492 = vmatprep.subr.mxu0 0.0
    %493 = vmatpush1.msra.mxu0 %v447
    %494 = vmatprep.subr.mxu0 0.0
    %495 = vmatpush2.msra.mxu0 0.0
    %496 = vmatprep.subr.mxu0 0.0
    %497 = vmatpush2.msra.mxu0 0.0
    %498 = vmatprep.subr.mxu0 0.0
    %499 = vmatpush2.msra.mxu0 0.0
    %500 = vmatprep.subr.mxu0 0.0
    %501 = vmatpush2.msra.mxu0 0.0
    %502 = vmatprep.subr.mxu0 0.0
    %503 = vmatpush2.msra.mxu0 0.0
    %504 = vmatprep.subr.mxu0 0.0
    %505 = vmatpush2.msra.mxu0 0.0
    %506 = vmatprep.subr.mxu0 0.0
    %507 = vmatpush2.msra.mxu0 0.0
    %508 = vmatprep.subr.mxu0 0.0
    %509 = vmatpush2.msra.mxu0 0.0
    %510 = vmatprep.subr.mxu0 0.0
    %511 = vmatpush2.msra.mxu0 0.0
    %512 = vmatprep.subr.mxu0 0.0
    %513 = vmatpush2.msra.mxu0 0.0
    %514 = vmatprep.subr.mxu0 0.0
    %515 = vmatpush2.msra.mxu0 0.0
    %516 = vmatprep.subr.mxu0 0.0
    %517 = vmatpush2.msra.mxu0 0.0
    %518 = vmatprep.subr.mxu0 0.0
    %519 = vmatpush2.msra.mxu0 0.0
    %520 = vmatprep.subr.mxu0 0.0
    %521 = vmatpush2.msra.mxu0 0.0
    %522 = vmatprep.subr.mxu0 0.0
    %523 = vmatpush2.msra.mxu0 0.0
    %524 = vmatprep.subr.mxu0 0.0
    %525 = vmatpush2.msra.mxu0 0.0
    %526 = vmatprep.mubr.f32.mxu0 0.0
    %527 = vmatmul.mubr.f32.gmra.mxu0 %v460
    %v528 = vpop.f32.mrf.mxu0
    %v529 = vadd.f32 %v458, %v528
    %v530 = vpop.f32.mrf.mxu0
    %531 = vdwg.mxu0
    %v532 = vlaneseq
    %v533 = vshrl.u32 %v532, 7
    %v534 = vsub.s32 1, %v533
    %v535 = vrot.slane %v453, %v534
    %v537 = vsel %vm54, %v454, 0
    %539 = vmatprep.subr.mxu0 0.0
    %540 = vmatpush1.msra.mxu0 0.0
    %541 = vmatprep.subr.mxu0 0.0
    %542 = vmatpush1.msra.mxu0 0.0
    %543 = vmatprep.subr.mxu0 0.0
    %544 = vmatpush1.msra.mxu0 0.0
    %545 = vmatprep.subr.mxu0 0.0
    %546 = vmatpush1.msra.mxu0 0.0
    %547 = vmatprep.subr.mxu0 0.0
    %548 = vmatpush1.msra.mxu0 0.0
    %549 = vmatprep.subr.mxu0 0.0
    %550 = vmatpush1.msra.mxu0 0.0
    %551 = vmatprep.subr.mxu0 0.0
    %552 = vmatpush1.msra.mxu0 0.0
    %553 = vmatprep.subr.mxu0 0.0
    %554 = vmatpush1.msra.mxu0 0.0
    %555 = vmatprep.subr.mxu0 0.0
    %556 = vmatpush1.msra.mxu0 0.0
    %557 = vmatprep.subr.mxu0 0.0
    %558 = vmatpush1.msra.mxu0 0.0
    %559 = vmatprep.subr.mxu0 0.0
    %560 = vmatpush1.msra.mxu0 0.0
    %561 = vmatprep.subr.mxu0 0.0
    %562 = vmatpush1.msra.mxu0 0.0
    %563 = vmatprep.subr.mxu0 0.0
    %564 = vmatpush1.msra.mxu0 %v452
    %565 = vmatprep.subr.mxu0 0.0
    %566 = vmatpush1.msra.mxu0 %v451
    %567 = vmatprep.subr.mxu0 0.0
    %568 = vmatpush1.msra.mxu0 %v450
    %569 = vmatprep.subr.mxu0 0.0
    %570 = vmatpush1.msra.mxu0 %v449
    %571 = vmatprep.subr.mxu0 0.0
    %572 = vmatpush2.msra.mxu0 0.0
    %573 = vmatprep.subr.mxu0 0.0
    %574 = vmatpush2.msra.mxu0 0.0
    %575 = vmatprep.subr.mxu0 0.0
    %576 = vmatpush2.msra.mxu0 0.0
    %577 = vmatprep.subr.mxu0 0.0
    %578 = vmatpush2.msra.mxu0 0.0
    %579 = vmatprep.subr.mxu0 0.0
    %580 = vmatpush2.msra.mxu0 0.0
    %581 = vmatprep.subr.mxu0 0.0
    %582 = vmatpush2.msra.mxu0 0.0
    %583 = vmatprep.subr.mxu0 0.0
    %584 = vmatpush2.msra.mxu0 0.0
    %585 = vmatprep.subr.mxu0 0.0
    %586 = vmatpush2.msra.mxu0 0.0
    %587 = vmatprep.subr.mxu0 0.0
    %588 = vmatpush2.msra.mxu0 0.0
    %589 = vmatprep.subr.mxu0 0.0
    %590 = vmatpush2.msra.mxu0 0.0
    %591 = vmatprep.subr.mxu0 0.0
    %592 = vmatpush2.msra.mxu0 0.0
    %593 = vmatprep.subr.mxu0 0.0
    %594 = vmatpush2.msra.mxu0 0.0
    %595 = vmatprep.subr.mxu0 0.0
    %596 = vmatpush2.msra.mxu0 0.0
    %597 = vmatprep.subr.mxu0 0.0
    %598 = vmatpush2.msra.mxu0 0.0
    %599 = vmatprep.subr.mxu0 0.0
    %600 = vmatpush2.msra.mxu0 0.0
    %601 = vmatprep.subr.mxu0 0.0
    %602 = vmatpush2.msra.mxu0 0.0
    %603 = vmatprep.mubr.f32.mxu0 0.0
    %604 = vmatmul.mubr.f32.gmra.mxu0 %v537
    %v605 = vpop.f32.mrf.mxu0
    %v606 = vadd.f32 %v535, %v605
    %v607 = vpop.f32.mrf.mxu0
    %608 = vdwg.mxu0
    %v609 = vadd.f32 %v529, %v606
    %v610 = vxor.u32 %v609, 2147483648
    %v611 = vmul.f32 %v610, 1.442695
    %v612 = vpow.pop %v611
    %v613 = vadd.f32 %v612, 1.0
    %v614 = vrcp.pop %v613
    %v615 = vmul.f32 1.0, %v614
    %617 = vrot.lane.b32.xlu0 %v606, 64
    %v618 = vpop.permute.xlu0 %617
    %v620 = vmul.f32 %v615, %v618
    %622 = vrot.lane.b32.xlu0 %v620, 64
    %v623 = vpop.permute.xlu0 %622
    %v625 = vadd.f32 %v529, %v623
    %v626 = vtanh.pop %v625
    %v627 = vsub.f32 1.0, %v615
    %629 = vrot.lane.b32.xlu0 %v626, 96
    %v630 = vpop.permute.xlu0 %629
    %v632 = vmul.f32 %v627, %v630
    %633 = vrot.lane.b32.xlu0 %v454, 32
    %v634 = vpop.permute.xlu0 %633
    %v636 = vmul.f32 %v615, %v634
    %v637 = vadd.f32 %v632, %v636
    %639 = vrot.lane.b32.xlu0 %v637, 96
    %v640 = vpop.permute.xlu0 %639
    %vm642 = vcmask 254976
    %643 = vst.msk [vmem:[#allocation8] sm:$0x3] %vm642, %v640
    %v644 = vld [vmem:[#allocation2 + $0x70] sm:$0xff]
    %v645 = vld [vmem:[#allocation2 + $0x78] sm:$0xff]
    %v646 = vld [vmem:[#allocation2 + $0x80] sm:$0xff]
    %v647 = vld [vmem:[#allocation2 + $0x88] sm:$0xff]
    %v648 = vld [vmem:[#allocation2 + $0x90] sm:$0xff]
    %v649 = vld [vmem:[#allocation2 + $0x98] sm:$0xff]
    %v650 = vld [vmem:[#allocation2 + $0xa0] sm:$0xff]
    %v651 = vld [vmem:[#allocation2 + $0xa8] sm:$0xff]
    %v652 = vld [vmem:[#allocation2 + $0xb0] sm:$0x3]
    %v653 = vld [vmem:[%s48] sm:$0x3]
    %v654 = vlaneseq
    %v655 = vshrl.u32 %v654, 7
    %v656 = vsub.s32 0, %v655
    %v657 = vrot.slane %v652, %v656
    %v658 = vsel %vm54, %v640, 0
    %660 = vmatprep.subr.mxu0 0.0
    %661 = vmatpush1.msra.mxu0 0.0
    %662 = vmatprep.subr.mxu0 0.0
    %663 = vmatpush1.msra.mxu0 0.0
    %664 = vmatprep.subr.mxu0 0.0
    %665 = vmatpush1.msra.mxu0 0.0
    %666 = vmatprep.subr.mxu0 0.0
    %667 = vmatpush1.msra.mxu0 0.0
    %668 = vmatprep.subr.mxu0 0.0
    %669 = vmatpush1.msra.mxu0 0.0
    %670 = vmatprep.subr.mxu0 0.0
    %671 = vmatpush1.msra.mxu0 0.0
    %672 = vmatprep.subr.mxu0 0.0
    %673 = vmatpush1.msra.mxu0 0.0
    %674 = vmatprep.subr.mxu0 0.0
    %675 = vmatpush1.msra.mxu0 0.0
    %676 = vmatprep.subr.mxu0 0.0
    %677 = vmatpush1.msra.mxu0 0.0
    %678 = vmatprep.subr.mxu0 0.0
    %679 = vmatpush1.msra.mxu0 0.0
    %680 = vmatprep.subr.mxu0 0.0
    %681 = vmatpush1.msra.mxu0 0.0
    %682 = vmatprep.subr.mxu0 0.0
    %683 = vmatpush1.msra.mxu0 0.0
    %684 = vmatprep.subr.mxu0 0.0
    %685 = vmatpush1.msra.mxu0 %v647
    %686 = vmatprep.subr.mxu0 0.0
    %687 = vmatpush1.msra.mxu0 %v646
    %688 = vmatprep.subr.mxu0 0.0
    %689 = vmatpush1.msra.mxu0 %v645
    %690 = vmatprep.subr.mxu0 0.0
    %691 = vmatpush1.msra.mxu0 %v644
    %692 = vmatprep.subr.mxu0 0.0
    %693 = vmatpush2.msra.mxu0 0.0
    %694 = vmatprep.subr.mxu0 0.0
    %695 = vmatpush2.msra.mxu0 0.0
    %696 = vmatprep.subr.mxu0 0.0
    %697 = vmatpush2.msra.mxu0 0.0
    %698 = vmatprep.subr.mxu0 0.0
    %699 = vmatpush2.msra.mxu0 0.0
    %700 = vmatprep.subr.mxu0 0.0
    %701 = vmatpush2.msra.mxu0 0.0
    %702 = vmatprep.subr.mxu0 0.0
    %703 = vmatpush2.msra.mxu0 0.0
    %704 = vmatprep.subr.mxu0 0.0
    %705 = vmatpush2.msra.mxu0 0.0
    %706 = vmatprep.subr.mxu0 0.0
    %707 = vmatpush2.msra.mxu0 0.0
    %708 = vmatprep.subr.mxu0 0.0
    %709 = vmatpush2.msra.mxu0 0.0
    %710 = vmatprep.subr.mxu0 0.0
    %711 = vmatpush2.msra.mxu0 0.0
    %712 = vmatprep.subr.mxu0 0.0
    %713 = vmatpush2.msra.mxu0 0.0
    %714 = vmatprep.subr.mxu0 0.0
    %715 = vmatpush2.msra.mxu0 0.0
    %716 = vmatprep.subr.mxu0 0.0
    %717 = vmatpush2.msra.mxu0 0.0
    %718 = vmatprep.subr.mxu0 0.0
    %719 = vmatpush2.msra.mxu0 0.0
    %720 = vmatprep.subr.mxu0 0.0
    %721 = vmatpush2.msra.mxu0 0.0
    %722 = vmatprep.subr.mxu0 0.0
    %723 = vmatpush2.msra.mxu0 0.0
    %724 = vmatprep.mubr.f32.mxu0 0.0
    %725 = vmatmul.mubr.f32.gmra.mxu0 %v658
    %v726 = vpop.f32.mrf.mxu0
    %v727 = vadd.f32 %v657, %v726
    %v728 = vpop.f32.mrf.mxu0
    %729 = vdwg.mxu0
    %v730 = vlaneseq
    %v731 = vshrl.u32 %v730, 7
    %v732 = vsub.s32 1, %v731
    %v733 = vrot.slane %v652, %v732
    %v735 = vsel %vm54, %v653, 0
    %737 = vmatprep.subr.mxu0 0.0
    %738 = vmatpush1.msra.mxu0 0.0
    %739 = vmatprep.subr.mxu0 0.0
    %740 = vmatpush1.msra.mxu0 0.0
    %741 = vmatprep.subr.mxu0 0.0
    %742 = vmatpush1.msra.mxu0 0.0
    %743 = vmatprep.subr.mxu0 0.0
    %744 = vmatpush1.msra.mxu0 0.0
    %745 = vmatprep.subr.mxu0 0.0
    %746 = vmatpush1.msra.mxu0 0.0
    %747 = vmatprep.subr.mxu0 0.0
    %748 = vmatpush1.msra.mxu0 0.0
    %749 = vmatprep.subr.mxu0 0.0
    %750 = vmatpush1.msra.mxu0 0.0
    %751 = vmatprep.subr.mxu0 0.0
    %752 = vmatpush1.msra.mxu0 0.0
    %753 = vmatprep.subr.mxu0 0.0
    %754 = vmatpush1.msra.mxu0 0.0
    %755 = vmatprep.subr.mxu0 0.0
    %756 = vmatpush1.msra.mxu0 0.0
    %757 = vmatprep.subr.mxu0 0.0
    %758 = vmatpush1.msra.mxu0 0.0
    %759 = vmatprep.subr.mxu0 0.0
    %760 = vmatpush1.msra.mxu0 0.0
    %761 = vmatprep.subr.mxu0 0.0
    %762 = vmatpush1.msra.mxu0 %v651
    %763 = vmatprep.subr.mxu0 0.0
    %764 = vmatpush1.msra.mxu0 %v650
    %765 = vmatprep.subr.mxu0 0.0
    %766 = vmatpush1.msra.mxu0 %v649
    %767 = vmatprep.subr.mxu0 0.0
    %768 = vmatpush1.msra.mxu0 %v648
    %769 = vmatprep.subr.mxu0 0.0
    %770 = vmatpush2.msra.mxu0 0.0
    %771 = vmatprep.subr.mxu0 0.0
    %772 = vmatpush2.msra.mxu0 0.0
    %773 = vmatprep.subr.mxu0 0.0
    %774 = vmatpush2.msra.mxu0 0.0
    %775 = vmatprep.subr.mxu0 0.0
    %776 = vmatpush2.msra.mxu0 0.0
    %777 = vmatprep.subr.mxu0 0.0
    %778 = vmatpush2.msra.mxu0 0.0
    %779 = vmatprep.subr.mxu0 0.0
    %780 = vmatpush2.msra.mxu0 0.0
    %781 = vmatprep.subr.mxu0 0.0
    %782 = vmatpush2.msra.mxu0 0.0
    %783 = vmatprep.subr.mxu0 0.0
    %784 = vmatpush2.msra.mxu0 0.0
    %785 = vmatprep.subr.mxu0 0.0
    %786 = vmatpush2.msra.mxu0 0.0
    %787 = vmatprep.subr.mxu0 0.0
    %788 = vmatpush2.msra.mxu0 0.0
    %789 = vmatprep.subr.mxu0 0.0
    %790 = vmatpush2.msra.mxu0 0.0
    %791 = vmatprep.subr.mxu0 0.0
    %792 = vmatpush2.msra.mxu0 0.0
    %793 = vmatprep.subr.mxu0 0.0
    %794 = vmatpush2.msra.mxu0 0.0
    %795 = vmatprep.subr.mxu0 0.0
    %796 = vmatpush2.msra.mxu0 0.0
    %797 = vmatprep.subr.mxu0 0.0
    %798 = vmatpush2.msra.mxu0 0.0
    %799 = vmatprep.subr.mxu0 0.0
    %800 = vmatpush2.msra.mxu0 0.0
    %801 = vmatprep.mubr.f32.mxu0 0.0
    %802 = vmatmul.mubr.f32.gmra.mxu0 %v735
    %v803 = vpop.f32.mrf.mxu0
    %v804 = vadd.f32 %v733, %v803
    %v805 = vpop.f32.mrf.mxu0
    %806 = vdwg.mxu0
    %v807 = vadd.f32 %v727, %v804
    %v808 = vxor.u32 %v807, 2147483648
    %v809 = vmul.f32 %v808, 1.442695
    %v810 = vpow.pop %v809
    %v811 = vadd.f32 %v810, 1.0
    %v812 = vrcp.pop %v811
    %v813 = vmul.f32 1.0, %v812
    %815 = vrot.lane.b32.xlu0 %v804, 64
    %v816 = vpop.permute.xlu0 %815
    %v818 = vmul.f32 %v813, %v816
    %820 = vrot.lane.b32.xlu0 %v818, 64
    %v821 = vpop.permute.xlu0 %820
    %v823 = vadd.f32 %v727, %v821
    %v824 = vtanh.pop %v823
    %v825 = vsub.f32 1.0, %v813
    %827 = vrot.lane.b32.xlu0 %v824, 96
    %v828 = vpop.permute.xlu0 %827
    %v830 = vmul.f32 %v825, %v828
    %831 = vrot.lane.b32.xlu0 %v653, 32
    %v832 = vpop.permute.xlu0 %831
    %v834 = vmul.f32 %v813, %v832
    %v835 = vadd.f32 %v830, %v834
    %837 = vrot.lane.b32.xlu0 %v835, 96
    %v838 = vpop.permute.xlu0 %837
    %s840 = scalar_lea.vmem [#allocation8], 2
    %841 = vst.msk [vmem:[%s840] sm:$0x3] %vm642, %v838
    %v842 = vld [vmem:[#allocation2 + $0xb8] sm:$0xff]
    %v843 = vld [vmem:[#allocation2 + $0xc0] sm:$0xff]
    %v844 = vld [vmem:[#allocation2 + $0xc8] sm:$0xff]
    %v845 = vld [vmem:[#allocation2 + $0xd0] sm:$0xff]
    %v846 = vld [vmem:[#allocation2 + $0xd8] sm:$0x1]
    %v847 = vlaneseq
    %v848 = vshrl.u32 %v847, 7
    %v849 = vsub.s32 0, %v848
    %v850 = vrot.slane %v846, %v849
    %v851 = vsel %vm54, %v838, 0
    %853 = vmatprep.subr.mxu0 0.0
    %854 = vmatpush1.msra.mxu0 0.0
    %855 = vmatprep.subr.mxu0 0.0
    %856 = vmatpush1.msra.mxu0 0.0
    %857 = vmatprep.subr.mxu0 0.0
    %858 = vmatpush1.msra.mxu0 0.0
    %859 = vmatprep.subr.mxu0 0.0
    %860 = vmatpush1.msra.mxu0 0.0
    %861 = vmatprep.subr.mxu0 0.0
    %862 = vmatpush1.msra.mxu0 0.0
    %863 = vmatprep.subr.mxu0 0.0
    %864 = vmatpush1.msra.mxu0 0.0
    %865 = vmatprep.subr.mxu0 0.0
    %866 = vmatpush1.msra.mxu0 0.0
    %867 = vmatprep.subr.mxu0 0.0
    %868 = vmatpush1.msra.mxu0 0.0
    %869 = vmatprep.subr.mxu0 0.0
    %870 = vmatpush1.msra.mxu0 0.0
    %871 = vmatprep.subr.mxu0 0.0
    %872 = vmatpush1.msra.mxu0 0.0
    %873 = vmatprep.subr.mxu0 0.0
    %874 = vmatpush1.msra.mxu0 0.0
    %875 = vmatprep.subr.mxu0 0.0
    %876 = vmatpush1.msra.mxu0 0.0
    %877 = vmatprep.subr.mxu0 0.0
    %878 = vmatpush1.msra.mxu0 %v845
    %879 = vmatprep.subr.mxu0 0.0
    %880 = vmatpush1.msra.mxu0 %v844
    %881 = vmatprep.subr.mxu0 0.0
    %882 = vmatpush1.msra.mxu0 %v843
    %883 = vmatprep.subr.mxu0 0.0
    %884 = vmatpush1.msra.mxu0 %v842
    %885 = vmatprep.subr.mxu0 0.0
    %886 = vmatpush2.msra.mxu0 0.0
    %887 = vmatprep.subr.mxu0 0.0
    %888 = vmatpush2.msra.mxu0 0.0
    %889 = vmatprep.subr.mxu0 0.0
    %890 = vmatpush2.msra.mxu0 0.0
    %891 = vmatprep.subr.mxu0 0.0
    %892 = vmatpush2.msra.mxu0 0.0
    %893 = vmatprep.subr.mxu0 0.0
    %894 = vmatpush2.msra.mxu0 0.0
    %895 = vmatprep.subr.mxu0 0.0
    %896 = vmatpush2.msra.mxu0 0.0
    %897 = vmatprep.subr.mxu0 0.0
    %898 = vmatpush2.msra.mxu0 0.0
    %899 = vmatprep.subr.mxu0 0.0
    %900 = vmatpush2.msra.mxu0 0.0
    %901 = vmatprep.subr.mxu0 0.0
    %902 = vmatpush2.msra.mxu0 0.0
    %903 = vmatprep.subr.mxu0 0.0
    %904 = vmatpush2.msra.mxu0 0.0
    %905 = vmatprep.subr.mxu0 0.0
    %906 = vmatpush2.msra.mxu0 0.0
    %907 = vmatprep.subr.mxu0 0.0
    %908 = vmatpush2.msra.mxu0 0.0
    %909 = vmatprep.subr.mxu0 0.0
    %910 = vmatpush2.msra.mxu0 0.0
    %911 = vmatprep.subr.mxu0 0.0
    %912 = vmatpush2.msra.mxu0 0.0
    %913 = vmatprep.subr.mxu0 0.0
    %914 = vmatpush2.msra.mxu0 0.0
    %915 = vmatprep.subr.mxu0 0.0
    %916 = vmatpush2.msra.mxu0 0.0
    %917 = vmatprep.mubr.f32.mxu0 0.0
    %918 = vmatmul.mubr.f32.gmra.mxu0 %v851
    %v919 = vpop.f32.mrf.mxu0
    %v920 = vadd.f32 %v850, %v919
    %v921 = vpop.f32.mrf.mxu0
    %922 = vdwg.mxu0
    %923 = vst.msk [vmem:[#allocation7] sm:$0x3] %vm642, %v920
    // Predicated region
    $region22: #{forward.1} parent=1 // pred_check
      _
    $region23: #{forward.1} parent=1 // pred_check_branch
      %925 = sbr.rel (0) target = $region25
    $region24: #{forward.1} parent=1 // pred_region
      %s927 = ssub.s32 32, 32
      %928 = vsyncadd [#allocation4], %s927
      %s930 = sshll.u32 [#allocation7], 4
      %s931 = int_to_ptr.vmem [resolvable:$true] %s930
      %933 = dma.vmem_to_hbm [thread:$0]  %s931, 32, %s3, [#allocation4]
    $region25: #{forward.1} parent=1 // pred_fallthru
      _
    // Predicated region
    $region26: #{forward.1} parent=1 // pred_check
      _
    $region27: #{forward.1} parent=1 // pred_check_branch
      %935 = sbr.rel (0) target = $region29
    $region28: #{forward.1} parent=1 // pred_region
      %s937 = ssub.s32 64, 64
      %938 = vsyncadd [#allocation9], %s937
      %s939 = sshll.u32 [#allocation8], 4
      %s940 = int_to_ptr.vmem [resolvable:$true] %s939
      %945 = dma.vmem_to_hbm [thread:$0]  %s940, 64, %s4, [#allocation9], 32, 32, 2
    $region29: #{forward.1} parent=1 // pred_fallthru
      _
    // Predicated region
    $region30: #{forward.1} parent=1 // pred_check
      _
    $region31: #{forward.1} parent=1 // pred_check_branch
      %947 = sbr.rel (0) target = $region33
    $region32: #{forward.1} parent=1 // pred_region
      %948 = dma.done [#allocation4], 32
    $region33: #{forward.1} parent=1 // pred_fallthru
      _
    // Predicated region
    $region34: #{forward.1} parent=1 // pred_check
      _
    $region35: #{forward.1} parent=1 // pred_check_branch
      %950 = sbr.rel (0) target = $region37
    $region36: #{forward.1} parent=1 // pred_region
      %951 = dma.done [#allocation9], 64
    $region37: #{forward.1} parent=1 // pred_fallthru
      _
    %952 = vsyncpa [#allocation3], 1
    %953 = vsyncpa [#allocation6], 1
    %954 = vsyncpa [#allocation4], 1
    %955 = vsyncpa [#allocation9], 1

</llo_original>
